<compile_context>
chip_gen: v7x
topology: tpu7x:2x2x1
jax: 0.10.0
libtpu: 0.0.40
codegen_flags: <defaults>
</compile_context>

<pallas_src>
import functools

import jax
import jax.numpy as jnp
from jax.experimental import pallas as pl
from jax.experimental.pallas import tpu as pltpu


# ---------------------------------------------------------------------------
# Kernels
# ---------------------------------------------------------------------------
def bn_fused_kernel(x_ref, gamma_ref, beta_ref, o_ref, *, inv_count, eps):
    """Single-block BN for small tensors: stats + normalize in one pass."""
    x = x_ref[...].astype(jnp.float32)                 # (N, C, HW)
    s = jnp.sum(x, axis=2, keepdims=True)              # (N, C, 1)
    sq = jnp.sum(x * x, axis=2, keepdims=True)         # (N, C, 1)
    s = jnp.sum(s, axis=0, keepdims=True)              # (1, C, 1)
    sq = jnp.sum(sq, axis=0, keepdims=True)            # (1, C, 1)
    mean = s * inv_count
    var = jnp.maximum(sq * inv_count - mean * mean, 0.0)
    scale = gamma_ref[...].astype(jnp.float32) * jax.lax.rsqrt(var + eps)
    shift = beta_ref[...].astype(jnp.float32) - mean * scale
    o_ref[...] = (x * scale + shift).astype(o_ref.dtype)


def bn_stats_kernel(x_ref, sum_ref, sq_ref, *, hw, tile, chunk):
    """Pass 1: lane-dense per-n partial sums / sums-of-squares.

    x_ref:   (C, tile) tile (batch dim squeezed), spatial on lanes.
    sum_ref: (C, chunk) f32 per-n partial sums (accumulated across HW tiles).
    sq_ref:  (C, chunk) f32 per-n partial sums of squares.
    """
    t = pl.program_id(1)

    @pl.when(t == 0)
    def _init():
        sum_ref[...] = jnp.zeros_like(sum_ref)
        sq_ref[...] = jnp.zeros_like(sq_ref)

    c = sum_ref.shape[0]
    nchunks = tile // chunk
    ragged = (hw % tile) != 0                     # static: tail lanes exist?

    if ragged:
        lane = jax.lax.broadcasted_iota(jnp.int32, (c, chunk), 1)  # hoisted
        base = t * tile

    def accum(j, off):
        xj = x_ref[:, pl.ds(off, chunk)].astype(jnp.float32)       # (C, chunk)
        if ragged:
            rem = hw - base - j * chunk           # valid lanes in this chunk
            xj = jnp.where(lane < rem, xj, 0.0)   # padded lanes contribute 0
        sum_ref[...] += xj                        # pure VPU adds, full vregs
        sq_ref[...] += xj * xj

    if nchunks <= 8:                              # short loop: static unroll
        for j in range(nchunks):
            accum(j, j * chunk)
    else:                                         # long loop: scf.for
        def body(j, carry):
            accum(j, pl.multiple_of(j * chunk, chunk))
            return carry
        jax.lax.fori_loop(0, nchunks, body, 0)


def bn_apply_kernel(x_ref, scale_ref, shift_ref, o_ref):
    """Pass 2: y = x * scale + shift  (== (x - mean) * rstd * gamma + beta)."""
    x = x_ref[...].astype(jnp.float32)            # (C, T)
    o_ref[...] = (x * scale_ref[...] + shift_ref[...]).astype(o_ref.dtype)


# ---------------------------------------------------------------------------
# Tiling helpers
# ---------------------------------------------------------------------------
def _vmem_budget_bytes():
    """Generation-aware VMEM limit (75% of physical, clamped to [32, 96] MiB)."""
    cap = 64 * 1024 * 1024                        # safe fallback (v7x-sized)
    try:
        cap = int(pltpu.get_tpu_info().vmem_capacity_bytes)
    except Exception:
        pass
    return max(32 * 1024 * 1024, min(cap * 3 // 4, 96 * 1024 * 1024))


def _pick_hw_tile(hw, c, max_tile_bytes):
    """Lane tile width T: multiple of 128 and <= hw (or hw itself when small),
    sized so a (C, T) f32 block stays under max_tile_bytes."""
    bytes_per_lane = 4 * max(c, 1)                # budget in f32
    max_lanes = max(128, max_tile_bytes // bytes_per_lane)
    if hw <= 128:
        return hw                                 # full (tiny) spatial axis
    if hw % 128 == 0 and hw <= max_lanes:
        return hw                                 # single tile, no tail
    t = min(max_lanes, (hw // 128) * 128)
    if t >= 512:
        t = (t // 512) * 512
    return t


def _pick_chunk(tile, c):
    """Inner accumulation width A (lane-dense accumulator / partial width)."""
    if tile % 128 != 0:
        return tile                               # hw < 128: whole axis
    want = 128 if c >= 64 else (256 if c >= 16 else 512)
    for a in (want, 256, 128):
        if tile % a == 0:
            return a
    return 128


# ---------------------------------------------------------------------------
# Wrapper
# ---------------------------------------------------------------------------
def batchnorm2d_train(x_nchw, eps=1e-5, gamma=None, beta=None,
                      fused_limit_bytes=2 * 1024 * 1024):
    """Training-mode BatchNorm2d forward (batch stats, biased variance)."""
    N, C, H, W = x_nchw.shape
    HW = H * W
    x3 = x_nchw.reshape(N, C, HW)                 # spatial -> lanes
    out_dtype = x_nchw.dtype
    inv_count = 1.0 / float(N * HW)

    if gamma is None:
        gamma = jnp.ones((C,), jnp.float32)       # fresh BatchNorm2d: weight=1
    if beta is None:
        beta = jnp.zeros((C,), jnp.float32)       # fresh BatchNorm2d: bias=0
    gamma = jnp.asarray(gamma, jnp.float32).reshape(C)
    beta = jnp.asarray(beta, jnp.float32).reshape(C)

    vmem_cap = _vmem_budget_bytes()

    # ---- small problems: one fused kernel (1 read + 1 write) ----
    if N * C * HW * 4 <= fused_limit_bytes:
        full_spec = pl.BlockSpec((N, C, HW), lambda i: (0, 0, 0))
        vec_spec = pl.BlockSpec((1, C, 1), lambda i: (0, 0, 0))
        y3 = pl.pallas_call(
            functools.partial(bn_fused_kernel, inv_count=inv_count,
                              eps=float(eps)),
            out_shape=jax.ShapeDtypeStruct((N, C, HW), out_dtype),
            grid=(1,),
            in_specs=[full_spec, vec_spec, vec_spec],
            out_specs=full_spec,
            compiler_params=pltpu.CompilerParams(
                dimension_semantics=("arbitrary",),
                vmem_limit_bytes=vmem_cap),
        )(x3, gamma.reshape(1, C, 1), beta.reshape(1, C, 1))
        return y3.reshape(N, C, H, W)

    # ---- large problems: two-pass streaming BN ----
    max_tile_bytes = min(8 * 1024 * 1024, vmem_cap // 6)
    T = _pick_hw_tile(HW, C, max_tile_bytes)
    A = _pick_chunk(T, C)
    grid = (N, pl.cdiv(HW, T))

    x_spec = pl.BlockSpec((None, C, T), lambda n, t: (n, 0, t))
    part_spec = pl.BlockSpec((None, C, A), lambda n, t: (n, 0, 0))

    # Pass 1: per-n lane-dense partial statistics (megacore-parallel over n).
    psum, psq = pl.pallas_call(
        functools.partial(bn_stats_kernel, hw=HW, tile=T, chunk=A),
        out_shape=(jax.ShapeDtypeStruct((N, C, A), jnp.float32),
                   jax.ShapeDtypeStruct((N, C, A), jnp.float32)),
        grid=grid,
        in_specs=[x_spec],
        out_specs=(part_spec, part_spec),
        compiler_params=pltpu.CompilerParams(
            dimension_semantics=("parallel", "arbitrary"),
            vmem_limit_bytes=vmem_cap),
    )(x3)

    # Tiny finalize in plain JAX: fold stats into scale / shift.
    tot = jnp.sum(psum, axis=(0, 2))              # (C,)
    totsq = jnp.sum(psq, axis=(0, 2))             # (C,)
    mean = tot * inv_count
    var = jnp.maximum(totsq * inv_count - mean * mean, 0.0)
    scale = gamma * jax.lax.rsqrt(var + float(eps))
    shift = beta - mean * scale
    scale2 = scale.reshape(C, 1)
    shift2 = shift.reshape(C, 1)

    # Pass 2: streaming normalize, output in input dtype.
    vec_spec = pl.BlockSpec((C, 1), lambda n, t: (0, 0))
    y3 = pl.pallas_call(
        bn_apply_kernel,
        out_shape=jax.ShapeDtypeStruct((N, C, HW), out_dtype),
        grid=grid,
        in_specs=[x_spec, vec_spec, vec_spec],
        out_specs=x_spec,
        compiler_params=pltpu.CompilerParams(
            dimension_semantics=("parallel", "parallel"),
            vmem_limit_bytes=vmem_cap),
    )(x3, scale2, shift2)

    return y3.reshape(N, C, H, W)
    # TODO(synk): running_mean/running_var momentum update (stateful buffers
    #             of the fresh nn.BatchNorm2d) never affects the reference
    #             forward output and is not materialized here.
    # TODO(synk): for very small C (<8) with huge HW, sublane occupancy could
    #             be improved by folding part of HW onto sublanes (review
    #             item 8); not implemented.


# ---------------------------------------------------------------------------
# Self-test
# ---------------------------------------------------------------------------
def _reference_bn(x, eps):
    mean = jnp.mean(x, axis=(0, 2, 3), keepdims=True)
    var = jnp.mean((x - mean) ** 2, axis=(0, 2, 3), keepdims=True)
    return (x - mean) * jax.lax.rsqrt(var + eps)


if __name__ == "__main__":
    eps = 1e-5
    key = jax.random.PRNGKey(0)

    cases = [
        ("fused",            (2, 4, 16, 16), None),  # small -> fused kernel
        ("tiled",            (2, 4, 16, 16), 0),     # force two-pass path
        ("tiled-ragged",     (2, 8, 10, 20), 0),     # HW=200: cdiv + tail mask
        ("tiled-multichunk", (2, 8, 32, 36), 0),     # HW=1152: fori inner loop
    ]
    for name, shape, fused_limit in cases:
        key, sub = jax.random.split(key)
        x = jax.random.normal(sub, shape, jnp.float32)
        if fused_limit is None:
            y = batchnorm2d_train(x, eps=eps)
        else:
            y = batchnorm2d_train(x, eps=eps, fused_limit_bytes=fused_limit)
        y = jax.block_until_ready(y)
        y_ref = _reference_bn(x, eps)
        assert y.shape == x.shape, (name, y.shape)
        assert y.dtype == x.dtype, (name, y.dtype)
        err = float(jnp.max(jnp.abs(y - y_ref)))
        assert err < 1e-4, (name, err)

    print("KERNEL_OK")
</pallas_src>

<mosaic_0001>
module attributes {stable_mosaic.version = 11 : i64} {
  func.func @bn_fused_kernel(%arg0: i32, %arg1: memref<2x4x256xf32, #tpu.memory_space<vmem>>, %arg2: memref<1x4x1xf32, #tpu.memory_space<vmem>>, %arg3: memref<1x4x1xf32, #tpu.memory_space<vmem>>, %arg4: memref<2x4x256xf32, #tpu.memory_space<vmem>>) attributes {dimension_semantics = [#tpu.dimension_semantics<arbitrary>], iteration_bounds = array<i64: 1>, scalar_prefetch = 0 : i64, scratch_operands = 0 : i64, tpu.core_type = #tpu.core_type<tc>, window_params = [{pipeline_mode = #tpu.pipeline_mode<synchronous>, transform_indices = @transform_0, window_bounds = array<i64: 2, 4, 256>}, {pipeline_mode = #tpu.pipeline_mode<synchronous>, transform_indices = @transform_1, window_bounds = array<i64: 1, 4, 1>}, {pipeline_mode = #tpu.pipeline_mode<synchronous>, transform_indices = @transform_2, window_bounds = array<i64: 1, 4, 1>}, {pipeline_mode = #tpu.pipeline_mode<synchronous>, transform_indices = @transform_3, window_bounds = array<i64: 2, 4, 256>}]} {
    %c0 = arith.constant 0 : index
    %c0_0 = arith.constant 0 : index
    %c0_1 = arith.constant 0 : index
    %0 = vector.load %arg1[%c0, %c0_0, %c0_1] : memref<2x4x256xf32, #tpu.memory_space<vmem>>, vector<2x4x256xf32>
    %cst = arith.constant dense<0.000000e+00> : vector<2x4xf32>
    %1 = vector.multi_reduction <add>, %0, %cst [2] : vector<2x4x256xf32> to vector<2x4xf32>
    %2 = vector.shape_cast %1 : vector<2x4xf32> to vector<2x4x1xf32>
    %3 = arith.mulf %0, %0 : vector<2x4x256xf32>
    %cst_2 = arith.constant dense<0.000000e+00> : vector<2x4xf32>
    %4 = vector.multi_reduction <add>, %3, %cst_2 [2] : vector<2x4x256xf32> to vector<2x4xf32>
    %5 = vector.shape_cast %4 : vector<2x4xf32> to vector<2x4x1xf32>
    %cst_3 = arith.constant dense<0.000000e+00> : vector<4x1xf32>
    %6 = vector.multi_reduction <add>, %2, %cst_3 [0] : vector<2x4x1xf32> to vector<4x1xf32>
    %7 = vector.shape_cast %6 : vector<4x1xf32> to vector<1x4x1xf32>
    %cst_4 = arith.constant dense<0.000000e+00> : vector<4x1xf32>
    %8 = vector.multi_reduction <add>, %5, %cst_4 [0] : vector<2x4x1xf32> to vector<4x1xf32>
    %9 = vector.shape_cast %8 : vector<4x1xf32> to vector<1x4x1xf32>
    %cst_5 = arith.constant 0.001953125 : f32
    %10 = vector.broadcast %cst_5 : f32 to vector<1x4x1xf32>
    %11 = arith.mulf %7, %10 : vector<1x4x1xf32>
    %cst_6 = arith.constant 0.001953125 : f32
    %12 = vector.broadcast %cst_6 : f32 to vector<1x4x1xf32>
    %13 = arith.mulf %9, %12 : vector<1x4x1xf32>
    %14 = arith.mulf %11, %11 : vector<1x4x1xf32>
    %15 = arith.subf %13, %14 : vector<1x4x1xf32>
    %cst_7 = arith.constant 0.000000e+00 : f32
    %16 = vector.broadcast %cst_7 : f32 to vector<1x4x1xf32>
    %17 = arith.maximumf %15, %16 : vector<1x4x1xf32>
    %c0_8 = arith.constant 0 : index
    %c0_9 = arith.constant 0 : index
    %c0_10 = arith.constant 0 : index
    %18 = vector.load %arg2[%c0_8, %c0_9, %c0_10] : memref<1x4x1xf32, #tpu.memory_space<vmem>>, vector<1x4x1xf32>
    %cst_11 = arith.constant 9.99999974E-6 : f32
    %19 = vector.broadcast %cst_11 : f32 to vector<1x4x1xf32>
    %20 = arith.addf %17, %19 : vector<1x4x1xf32>
    %21 = math.rsqrt %20 : vector<1x4x1xf32>
    %22 = arith.mulf %18, %21 : vector<1x4x1xf32>
    %c0_12 = arith.constant 0 : index
    %c0_13 = arith.constant 0 : index
    %c0_14 = arith.constant 0 : index
    %23 = vector.load %arg3[%c0_12, %c0_13, %c0_14] : memref<1x4x1xf32, #tpu.memory_space<vmem>>, vector<1x4x1xf32>
    %24 = arith.mulf %11, %22 : vector<1x4x1xf32>
    %25 = arith.subf %23, %24 : vector<1x4x1xf32>
    %26 = vector.broadcast %22 : vector<1x4x1xf32> to vector<2x4x256xf32>
    %27 = arith.mulf %0, %26 : vector<2x4x256xf32>
    %28 = vector.broadcast %25 : vector<1x4x1xf32> to vector<2x4x256xf32>
    %29 = arith.addf %27, %28 : vector<2x4x256xf32>
    %c0_15 = arith.constant 0 : index
    %c0_16 = arith.constant 0 : index
    %c0_17 = arith.constant 0 : index
    %30 = vector.load %arg4[%c0_15, %c0_16, %c0_17] : memref<2x4x256xf32, #tpu.memory_space<vmem>>, vector<2x4x256xf32>
    tpu.vector_store %arg4[%c0_15, %c0_16, %c0_17], %29 {strides = array<i32>} : memref<2x4x256xf32, #tpu.memory_space<vmem>>, vector<2x4x256xf32>,
    return
  }
  func.func @transform_0(%arg0: i32) -> (i32, i32, i32) {
    %c0_i32 = arith.constant 0 : i32
    %c0_i32_0 = arith.constant 0 : i32
    %c0_i32_1 = arith.constant 0 : i32
    %c0_i32_2 = arith.constant 0 : i32
    return %c0_i32, %c0_i32_0, %c0_i32_1 : i32, i32, i32
  }
  func.func @transform_1(%arg0: i32) -> (i32, i32, i32) {
    %c0_i32 = arith.constant 0 : i32
    %c0_i32_0 = arith.constant 0 : i32
    %c0_i32_1 = arith.constant 0 : i32
    %c0_i32_2 = arith.constant 0 : i32
    return %c0_i32, %c0_i32_0, %c0_i32_1 : i32, i32, i32
  }
  func.func @transform_2(%arg0: i32) -> (i32, i32, i32) {
    %c0_i32 = arith.constant 0 : i32
    %c0_i32_0 = arith.constant 0 : i32
    %c0_i32_1 = arith.constant 0 : i32
    %c0_i32_2 = arith.constant 0 : i32
    return %c0_i32, %c0_i32_0, %c0_i32_1 : i32, i32, i32
  }
  func.func @transform_3(%arg0: i32) -> (i32, i32, i32) {
    %c0_i32 = arith.constant 0 : i32
    %c0_i32_0 = arith.constant 0 : i32
    %c0_i32_1 = arith.constant 0 : i32
    %c0_i32_2 = arith.constant 0 : i32
    return %c0_i32, %c0_i32_0, %c0_i32_1 : i32, i32, i32
  }
}

</mosaic_0001>

<llo_original>
// kernel: tpu_custom_call.1
$region0: #{tpu_custom_call.1}
  #allocation0 [shape = 'u32[]', space=smem, size = 0x4, offset = 0x4, fixed_abs, tag = 'smem constant byte address 0x4 - core index']
  #allocation1 [shape = 'u32[144,128]{1,0:T(1,128)}', space=vmem, size = 0x12000, scoped, tag = 'internal scratch']
  %s0 = inlined_call_operand.hbm [shape: f32[2,4,256], index: 0, kind: input, shape index: {}]
  %s1 = inlined_call_operand.vmem [shape: f32[1,4,1], index: 1, kind: input, shape index: {}]
  %s2 = inlined_call_operand.vmem [shape: f32[1,4,1], index: 2, kind: input, shape index: {}]
  %s3 = inlined_call_operand.hbm [shape: f32[2,4,256], index: 3, kind: output, shape index: {}]
  %s4 = sld [smem:[#allocation0]]
  $region26: #{tpu_custom_call.1} parent=0
    _
  %s6 = ssub.s32 1, %s4
  %s7 = scalar_select 0, %s6, %s4
  $region1: #{tpu_custom_call.1} parent=0
    #allocation2 [shape = 'u8[8192]{0}', space=vmem, size = 0x2000, scoped, tag = 'input window, operand 0, single buffered']
    #allocation3 [shape = 's32[1]{0}', space=sflag, size = 0x4, scoped, tag = 'scoped memory for tpu_custom_call.1']
    #allocation4 [shape = 's32[1]{0}', space=sflag, size = 0x4, scoped, tag = 'scoped memory for tpu_custom_call.1']
    #allocation5 [shape = 'u8[8192]{0}', space=vmem, size = 0x2000, scoped, tag = 'output window, operand 0, single buffered']
    %8 = vsyncpa [#allocation3], 0
    %9 = vsyncpa [#allocation4], 0
    // Predicated region
    $region2: #{tpu_custom_call.1} parent=1 // pred_check
      _
    $region3: #{tpu_custom_call.1} parent=1 // pred_check_branch
      %11 = sbr.rel (0) target = $region5
    $region4: #{tpu_custom_call.1} parent=1 // pred_region
      %s13 = ssub.s32 256, 256
      %14 = vsyncadd [#allocation3], %s13
      %s15 = sshll.u32 [#allocation2], 4
      %s16 = int_to_ptr.vmem [resolvable:$true] %s15
      %21 = dma.hbm_to_vmem [thread:$0]  %s0, 256, %s16, [#allocation3], 128, 128, 8
    $region5: #{tpu_custom_call.1} parent=1 // pred_fallthru
      _
    // Predicated region
    $region6: #{tpu_custom_call.1} parent=1 // pred_check
      _
    $region7: #{tpu_custom_call.1} parent=1 // pred_check_branch
      %23 = sbr.rel (0) target = $region9
    $region8: #{tpu_custom_call.1} parent=1 // pred_region
      _
    $region9: #{tpu_custom_call.1} parent=1 // pred_fallthru
      _
    // Predicated region
    $region10: #{tpu_custom_call.1} parent=1 // pred_check
      _
    $region11: #{tpu_custom_call.1} parent=1 // pred_check_branch
      %25 = sbr.rel (0) target = $region13
    $region12: #{tpu_custom_call.1} parent=1 // pred_region
      _
    $region13: #{tpu_custom_call.1} parent=1 // pred_fallthru
      _
    // Predicated region
    $region14: #{tpu_custom_call.1} parent=1 // pred_check
      _
    $region15: #{tpu_custom_call.1} parent=1 // pred_check_branch
      %27 = sbr.rel (0) target = $region17
    $region16: #{tpu_custom_call.1} parent=1 // pred_region
      %28 = dma.done [#allocation3], 256
    $region17: #{tpu_custom_call.1} parent=1 // pred_fallthru
      _
    %v29 = vld [vmem:[#allocation2] sm:$0xff]
    %v30 = vld [vmem:[#allocation2 + $0x8] sm:$0xff]
    %v33 = vcombine.high %v29, %v29
    %v34 = vcombine.high %v30, %v30
    %vm37 = vcmask 1043456
    %v38 = vsel %vm37, %v29, 0.0
    %v39 = vsel %vm37, %v33, 0.0
    %v40 = vadd.f32 %v38, %v39
    %41 = vadd.xlane.f32.xlu0 %v40
    %v42 = vpop.xlane.xlu0 %41
    %v43 = vsel %vm37, %v30, 0.0
    %v44 = vsel %vm37, %v34, 0.0
    %v45 = vadd.f32 %v43, %v44
    %46 = vadd.xlane.f32.xlu0 %v45
    %v47 = vpop.xlane.xlu0 %46
    %v48 = vmul.f32 %v29, %v29
    %v49 = vmul.f32 %v30, %v30
    %v52 = vcombine.high %v48, %v48
    %v53 = vcombine.high %v49, %v49
    %v56 = vsel %vm37, %v48, 0.0
    %v57 = vsel %vm37, %v52, 0.0
    %v58 = vadd.f32 %v56, %v57
    %59 = vadd.xlane.f32.xlu0 %v58
    %v60 = vpop.xlane.xlu0 %59
    %v61 = vsel %vm37, %v49, 0.0
    %v62 = vsel %vm37, %v53, 0.0
    %v63 = vadd.f32 %v61, %v62
    %64 = vadd.xlane.f32.xlu0 %v63
    %v65 = vpop.xlane.xlu0 %64
    %v66 = vsel %vm37, %v42, 0.0
    %v67 = vsel %vm37, %v47, 0.0
    %v68 = vadd.f32 %v66, %v67
    %v69 = vsel %vm37, %v60, 0.0
    %v70 = vsel %vm37, %v65, 0.0
    %v71 = vadd.f32 %v69, %v70
    %v72 = vmul.f32 %v68, 0.001953125
    %v73 = vmul.f32 %v71, 0.001953125
    %v74 = vmul.f32 %v72, %v72
    %v75 = vsub.f32 %v73, %v74
    %v76 = vmax.f32 %v75, 0.0
    %v77 = vld [vmem:[%s1] sm:$0xf]
    %v78 = vadd.f32 %v76, 1e-05
    %v79 = vrsqrt.pop %v78
    %v80 = vmul.f32 %v77, %v79
    %v81 = vld [vmem:[%s2] sm:$0xf]
    %v82 = vmul.f32 %v72, %v80
    %v83 = vsub.f32 %v81, %v82
    %85 = vset.pattern.permute.xlu0 0
    %86 = vperm.xlu0 %85, %v80
    %v87 = vpop.permute.xlu0 %86
    %v89 = vunpack.c.l.s4 839922192
    %v90 = vunpack.c.0.s8 %v89
    %v91 = vlaneseq
    %v92 = vshrl.u32 %v91, 7
    %v93 = vsub.s32 %v90, %v92
    %v94 = vrot.slane %v87, %v93
    %v96 = vmul.f32 %v29, %v94
    %v97 = vmul.f32 %v30, %v94
    %99 = vset.pattern.permute.xlu0 0
    %100 = vperm.xlu0 %99, %v83
    %v101 = vpop.permute.xlu0 %100
    %v103 = vunpack.c.l.s4 839922192
    %v104 = vunpack.c.0.s8 %v103
    %v105 = vlaneseq
    %v106 = vshrl.u32 %v105, 7
    %v107 = vsub.s32 %v104, %v106
    %v108 = vrot.slane %v101, %v107
    %v110 = vadd.f32 %v96, %v108
    %v111 = vadd.f32 %v97, %v108
    %112 = vst [vmem:[#allocation5] sm:$0xff] %v110
    %113 = vst [vmem:[#allocation5 + $0x8] sm:$0xff] %v111
    // Predicated region
    $region18: #{tpu_custom_call.1} parent=1 // pred_check
      _
    $region19: #{tpu_custom_call.1} parent=1 // pred_check_branch
      %115 = sbr.rel (0) target = $region21
    $region20: #{tpu_custom_call.1} parent=1 // pred_region
      %s117 = ssub.s32 256, 256
      %118 = vsyncadd [#allocation4], %s117
      %s119 = sshll.u32 [#allocation5], 4
      %s120 = int_to_ptr.vmem [resolvable:$true] %s119
      %125 = dma.vmem_to_hbm [thread:$0]  %s120, 256, %s3, [#allocation4], 128, 128, 8
    $region21: #{tpu_custom_call.1} parent=1 // pred_fallthru
      _
    // Predicated region
    $region22: #{tpu_custom_call.1} parent=1 // pred_check
      _
    $region23: #{tpu_custom_call.1} parent=1 // pred_check_branch
      %127 = sbr.rel (0) target = $region25
    $region24: #{tpu_custom_call.1} parent=1 // pred_region
      %128 = dma.done [#allocation4], 256
    $region25: #{tpu_custom_call.1} parent=1 // pred_fallthru
      _
    %129 = vsyncpa [#allocation3], 1
    %130 = vsyncpa [#allocation4], 1

</llo_original>
